<compile_context>
chip_gen: v6e
topology: v6e:2x2x1
jax: 0.10.0
libtpu: 0.0.40
codegen_flags: <defaults>
</compile_context>

<pallas_src>
import functools

import jax
import jax.numpy as jnp
from jax.experimental import pallas as pl
from jax.experimental.pallas import tpu as pltpu

P_EXP = 3.0     # GeM norm p (module arg `norm`)
EPS = 1e-6      # module default eps

_ROW_TILE_MAX = 256     # sublane (row) tile upper bound
_LANE_TILE_MAX = 4096   # lane (reduction) tile upper bound (elements)


def _cdiv(a, b):
    return (a + b - 1) // b


def _round_up(a, b):
    return _cdiv(a, b) * b


def _pow_pos(x, p):
    """x**p for x > 0. Integer p -> VPU multiplies (exact, no EUP); else exp/log."""
    ip = int(round(p))
    if abs(float(p) - ip) < 1e-12 and 1 <= ip <= 16:
        acc, base, e = None, x, ip
        while e:                      # binary exponentiation, traced statically
            if e & 1:
                acc = base if acc is None else acc * base
            e >>= 1
            if e:
                base = base * base
        return acc
    return jnp.exp(p * jnp.log(x))


def _gemp_kernel(x_ref, o_ref, acc_ref, *, p, eps, n_true, tn):
    """x_ref: (TR, TN) input block; o_ref: (1, TR, 1) out block; acc_ref: (TR, 1) f32."""
    k = pl.program_id(1)
    last_k = pl.num_programs(1) - 1
    rem = n_true % tn   # static; nonzero only when the last lane block is partial

    @pl.when(k == 0)
    def _():
        acc_ref[...] = jnp.zeros_like(acc_ref)

    def accumulate(mask_tail):
        x = x_ref[...].astype(jnp.float32)        # (TR, TN)
        x = jnp.maximum(x, eps)                   # clamp(min=eps)
        xp = _pow_pos(x, p)                       # x**p (VPU-only for integer p)
        if mask_tail:
            col = jax.lax.broadcasted_iota(jnp.int32, xp.shape, 1)
            xp = jnp.where(col < rem, xp, 0.0)    # zero the OOB tail lanes
        acc_ref[...] += jnp.sum(xp, axis=-1, keepdims=True)   # (TR, 1) f32

    if rem:
        # Pay the iota/compare/select only on the single block containing padding.
        @pl.when(k != last_k)
        def _():
            accumulate(False)

        @pl.when(k == last_k)
        def _():
            accumulate(True)
    else:
        accumulate(False)

    @pl.when(k == last_k)
    def _():
        mean = acc_ref[...] * (1.0 / n_true)              # (TR, 1)
        res = jnp.exp(jnp.log(mean) * (1.0 / p))          # mean**(1/p), O(TR) EUP work
        # Output traffic is only O(B*C) elements total (vs O(B*C*H*W) streamed in),
        # so one sublane-major store per row block is immaterial; this replaces the
        # old O(TR^2) eye construction + MXU matmul relayout.
        o_ref[0] = res.astype(o_ref.dtype)                # (TR, 1)


def gemp(x, p=P_EXP, eps=EPS):
    """GeM pooling (output_size=1). x: (B, C, H, W) -> (B, C, 1, 1).

    Note: p and eps are baked in as compile-time constants (module use-case);
    do not pass traced values for them.
    """
    B, C, H, W = x.shape
    R, N = B * C, H * W
    xf = x.reshape(R, N)                           # layout-preserving; no HBM copy
    dt = jnp.dtype(x.dtype)
    sub = {4: 8, 2: 16, 1: 32}.get(dt.itemsize, 8)  # sublane multiple per dtype

    # Lane (reduction) tile: whole row when it fits (no pad, no mask); otherwise
    # a 128-multiple tile, masking only the final partial block in-kernel.
    tn = N if N <= _LANE_TILE_MAX else _LANE_TILE_MAX
    n_blocks = _cdiv(N, tn)

    # Row (sublane) tile: whole R when it fits; if that would leave a single row
    # block, split into >=128-row halves so the "parallel" axis can be sharded
    # across v7x's 2 TensorCores; cap at 256 (a multiple of 8/16/32).
    if R <= _ROW_TILE_MAX:
        tr = R
        if R > 128:
            tr = max(128, _round_up(_cdiv(R, 2), sub))
    else:
        tr = _ROW_TILE_MAX
    r_blocks = _cdiv(R, tr)

    grid = (r_blocks, n_blocks)
    kernel = functools.partial(_gemp_kernel, p=float(p), eps=float(eps),
                               n_true=N, tn=tn)

    itemsize = dt.itemsize
    out = pl.pallas_call(
        kernel,
        out_shape=jax.ShapeDtypeStruct((r_blocks, tr, 1), x.dtype),
        grid_spec=pltpu.PrefetchScalarGridSpec(
            num_scalar_prefetch=0,
            grid=grid,
            in_specs=[pl.BlockSpec((tr, tn), lambda i, k: (i, k))],
            out_specs=pl.BlockSpec((1, tr, 1), lambda i, k: (i, 0, 0)),
            scratch_shapes=[pltpu.VMEM((tr, 1), jnp.float32)],
        ),
        compiler_params=pltpu.CompilerParams(
            dimension_semantics=("parallel", "arbitrary"),
            # Max input block is 256x4096 f32 = 4 MiB (8 MiB double-buffered);
            # 32 MiB covers v5e's 16 MiB default scoped limit and is safe on
            # v6e/v7x (<= physical VMEM).
            vmem_limit_bytes=32 * 1024 * 1024,
        ),
        cost_estimate=pl.CostEstimate(
            flops=4 * R * N,              # clamp + 2 muls + add per element
            transcendentals=2 * R,        # log+exp only in the finalize
            bytes_accessed=itemsize * R * N + itemsize * R),
    )(xf)

    return out.reshape(r_blocks * tr)[:R].reshape(B, C, 1, 1)


def gemp_ref(x, p=P_EXP, eps=EPS):
    xf = jnp.maximum(x.astype(jnp.float32), eps) ** p
    m = jnp.mean(xf, axis=(-2, -1), keepdims=True)
    return (m ** (1.0 / p)).astype(x.dtype)


if __name__ == "__main__":
    key = jax.random.PRNGKey(0)

    # Primary check: shapes implied by the module usage.
    B, C, H, W = 2, 4, 16, 16
    x = jax.random.uniform(key, (B, C, H, W), dtype=jnp.float32,
                           minval=0.0, maxval=2.0)
    out = gemp(x)
    jax.block_until_ready(out)
    ref = gemp_ref(x)
    assert out.shape == (B, C, 1, 1), out.shape
    assert jnp.allclose(out, ref, rtol=1e-5, atol=1e-5), (out, ref)

    # Secondary check: exercises the multi-block reduction with a masked partial
    # last lane block (65*65 = 4225 > 4096) and a partial last row block
    # (R = 144 > 128 -> two 128-row blocks).
    key2 = jax.random.PRNGKey(0)
    x2 = jax.random.uniform(key2, (2, 72, 65, 65), dtype=jnp.float32,
                            minval=0.0, maxval=2.0)
    out2 = gemp(x2)
    jax.block_until_ready(out2)
    ref2 = gemp_ref(x2)
    assert out2.shape == (2, 72, 1, 1), out2.shape
    assert jnp.allclose(out2, ref2, rtol=1e-4, atol=1e-5), (out2, ref2)

    print("KERNEL_OK")
</pallas_src>

<mosaic_0001>
module attributes {stable_mosaic.version = 11 : i64} {
  func.func @_gemp_kernel(%arg0: i32, %arg1: i32, %arg2: memref<8x256xf32, #tpu.memory_space<vmem>>, %arg3: memref<1x8x1xf32, #tpu.memory_space<vmem>>, %arg4: memref<8x1xf32, #tpu.memory_space<vmem>>) attributes {dimension_semantics = [#tpu.dimension_semantics<parallel>, #tpu.dimension_semantics<arbitrary>], iteration_bounds = array<i64: 1, 1>, scalar_prefetch = 0 : i64, scratch_operands = 1 : i64, tpu.core_type = #tpu.core_type<tc>, window_params = [{transform_indices = @transform_0, window_bounds = array<i64: 8, 256>}, {transform_indices = @transform_1, window_bounds = array<i64: 1, 8, 1>}]} {
    %c0_i32 = arith.constant 0 : i32
    %0 = arith.cmpi eq, %arg1, %c0_i32 : i32
    %1 = arith.extui %0 : i1 to i32
    %c0_i32_0 = arith.constant 0 : i32
    %2 = arith.cmpi ne, %1, %c0_i32_0 : i32
    scf.if %2 {
      %cst_9 = arith.constant 0.000000e+00 : f32
      %16 = vector.broadcast %cst_9 : f32 to vector<8x1xf32>
      %c0_10 = arith.constant 0 : index
      %c0_11 = arith.constant 0 : index
      %17 = vector.load %arg4[%c0_10, %c0_11] : memref<8x1xf32, #tpu.memory_space<vmem>>, vector<8x1xf32>
      tpu.vector_store %arg4[%c0_10, %c0_11], %16 {strides = array<i32>} : memref<8x1xf32, #tpu.memory_space<vmem>>, vector<8x1xf32>,
    } else {
    }
    %c0 = arith.constant 0 : index
    %c0_1 = arith.constant 0 : index
    %3 = vector.load %arg2[%c0, %c0_1] : memref<8x256xf32, #tpu.memory_space<vmem>>, vector<8x256xf32>
    %cst = arith.constant 9.99999997E-7 : f32
    %4 = vector.broadcast %cst : f32 to vector<8x256xf32>
    %5 = arith.maximumf %3, %4 : vector<8x256xf32>
    %6 = arith.mulf %5, %5 : vector<8x256xf32>
    %7 = arith.mulf %5, %6 : vector<8x256xf32>
    %c0_2 = arith.constant 0 : index
    %c0_3 = arith.constant 0 : index
    %8 = vector.load %arg4[%c0_2, %c0_3] : memref<8x1xf32, #tpu.memory_space<vmem>>, vector<8x1xf32>
    %cst_4 = arith.constant dense<0.000000e+00> : vector<8xf32>
    %9 = vector.multi_reduction <add>, %7, %cst_4 [1] : vector<8x256xf32> to vector<8xf32>
    %10 = vector.shape_cast %9 : vector<8xf32> to vector<8x1xf32>
    %11 = arith.addf %8, %10 : vector<8x1xf32>
    %c0_5 = arith.constant 0 : index
    %c0_6 = arith.constant 0 : index
    %12 = vector.load %arg4[%c0_5, %c0_6] : memref<8x1xf32, #tpu.memory_space<vmem>>, vector<8x1xf32>
    tpu.vector_store %arg4[%c0_5, %c0_6], %11 {strides = array<i32>} : memref<8x1xf32, #tpu.memory_space<vmem>>, vector<8x1xf32>,
    %c0_i32_7 = arith.constant 0 : i32
    %13 = arith.cmpi eq, %arg1, %c0_i32_7 : i32
    %14 = arith.extui %13 : i1 to i32
    %c0_i32_8 = arith.constant 0 : i32
    %15 = arith.cmpi ne, %14, %c0_i32_8 : i32
    scf.if %15 {
      %c0_9 = arith.constant 0 : index
      %c0_10 = arith.constant 0 : index
      %16 = vector.load %arg4[%c0_9, %c0_10] : memref<8x1xf32, #tpu.memory_space<vmem>>, vector<8x1xf32>
      %cst_11 = arith.constant 3.906250e-03 : f32
      %17 = vector.broadcast %cst_11 : f32 to vector<8x1xf32>
      %18 = arith.mulf %16, %17 : vector<8x1xf32>
      %19 = math.log %18 : vector<8x1xf32>
      %cst_12 = arith.constant 0.333333343 : f32
      %20 = vector.broadcast %cst_12 : f32 to vector<8x1xf32>
      %21 = arith.mulf %19, %20 : vector<8x1xf32>
      %22 = math.exp %21 : vector<8x1xf32>
      %c0_13 = arith.constant 0 : index
      %c0_14 = arith.constant 0 : index
      %c0_15 = arith.constant 0 : index
      %23 = vector.load %arg3[%c0_13, %c0_14, %c0_15] : memref<1x8x1xf32, #tpu.memory_space<vmem>>, vector<1x8x1xf32>
      %24 = vector.shape_cast %23 : vector<1x8x1xf32> to vector<8x1xf32>
      %25 = vector.shape_cast %22 : vector<8x1xf32> to vector<1x8x1xf32>
      tpu.vector_store %arg3[%c0_13, %c0_14, %c0_15], %25 {strides = array<i32>} : memref<1x8x1xf32, #tpu.memory_space<vmem>>, vector<1x8x1xf32>,
    } else {
    }
    return
  }
  func.func @transform_0(%arg0: i32, %arg1: i32) -> (i32, i32) {
    %c0_i32 = arith.constant 0 : i32
    return %arg0, %arg1 : i32, i32
  }
  func.func @transform_1(%arg0: i32, %arg1: i32) -> (i32, i32, i32) {
    %c0_i32 = arith.constant 0 : i32
    %c0_i32_0 = arith.constant 0 : i32
    %c0_i32_1 = arith.constant 0 : i32
    return %arg0, %c0_i32, %c0_i32_0 : i32, i32, i32
  }
}

</mosaic_0001>

<llo_original>
// kernel: tpu_custom_call.1
$region0: #{tpu_custom_call.1}
  #allocation0 [shape = 'u32[]', space=smem, size = 0x4, offset = 0x4, fixed_abs, tag = 'smem constant byte address 0x4 - core index']
  #allocation1 [shape = 'u32[144,128]{1,0:T(1,128)}', space=vmem, size = 0x12000, scoped, tag = 'internal scratch']
  #allocation2 [shape = 'f32[8,1]{1,0:T(8,128)}', space=vmem, size = 0x1000, scoped, tag = 'scratch operand']
  %s0 = inlined_call_operand.hbm [shape: f32[8,256], index: 0, kind: input, shape index: {}]
  %s1 = inlined_call_operand.vmem [shape: f32[1,8,1], index: 1, kind: output, shape index: {}]
  %s2 = sld [smem:[#allocation0]]
  $region26: #{tpu_custom_call.1} parent=0
    _
  %s4 = ssub.s32 1, %s2
  %s5 = scalar_select 0, %s4, %s2
  $region1: #{tpu_custom_call.1} parent=0
    #allocation3 [shape = 'u8[8192]{0}', space=vmem, size = 0x2000, scoped, tag = 'input window, operand 0, single buffered']
    #allocation4 [shape = 's32[1]{0}', space=sflag, size = 0x4, scoped, tag = 'scoped memory for tpu_custom_call.1']
    %6 = vsyncpa [#allocation4], 0
    // Predicated region
    $region2: #{tpu_custom_call.1} parent=1 // pred_check
      _
    $region3: #{tpu_custom_call.1} parent=1 // pred_check_branch
      %8 = sbr.rel (0) target = $region5
    $region4: #{tpu_custom_call.1} parent=1 // pred_region
      %s10 = ssub.s32 256, 256
      %11 = vsyncadd [#allocation4], %s10
      %s13 = sshll.u32 [#allocation3], 4
      %s14 = int_to_ptr.vmem [resolvable:$true] %s13
      %16 = dma.hbm_to_vmem [thread:$0]  %s0, 256, %s14, [#allocation4]
    $region5: #{tpu_custom_call.1} parent=1 // pred_fallthru
      _
    // Predicated region
    $region6: #{tpu_custom_call.1} parent=1 // pred_check
      _
    $region7: #{tpu_custom_call.1} parent=1 // pred_check_branch
      %18 = sbr.rel (0) target = $region9
    $region8: #{tpu_custom_call.1} parent=1 // pred_region
      %19 = dma.done [#allocation4], 256
    $region9: #{tpu_custom_call.1} parent=1 // pred_fallthru
      _
    %p20 = scmp.eq.s32.totalorder 0, 0
    // Predicated region
    $region10: #{tpu_custom_call.1} parent=1 // pred_check
      %p21 = pneg %p20
    $region11: #{tpu_custom_call.1} parent=1 // pred_check_branch
      %23 = sbr.rel (%p21) target = $region13
    $region12: #{tpu_custom_call.1} parent=1 // pred_region
      %vm24 = vcmask 7168
      %25 = vst.msk [vmem:[#allocation2] sm:$0xff] %vm24, 0.0
    $region13: #{tpu_custom_call.1} parent=1 // pred_fallthru
      _
    %v26 = vld [vmem:[#allocation3] sm:$0xff]
    %v27 = vld [vmem:[#allocation3 + $0x8] sm:$0xff]
    %v28 = vmax.f32 %v26, 1e-06
    %v29 = vmax.f32 %v27, 1e-06
    %v30 = vmul.f32 %v28, %v28
    %v31 = vmul.f32 %v29, %v29
    %v32 = vmul.f32 %v28, %v30
    %v33 = vmul.f32 %v29, %v31
    %v34 = vld [vmem:[#allocation2] sm:$0xff]
    %v35 = vadd.f32 %v32, %v33
    %36 = vadd.xlane.f32.xlu0 %v35
    %v37 = vpop.xlane.xlu0 %36
    %v38 = vadd.f32 %v34, %v37
    %vm39 = vcmask 7168
    %40 = vst.msk [vmem:[#allocation2] sm:$0xff] %vm39, %v38
    // Predicated region
    $region14: #{tpu_custom_call.1} parent=1 // pred_check
      %p41 = pneg %p20
    $region15: #{tpu_custom_call.1} parent=1 // pred_check_branch
      %43 = sbr.rel (%p41) target = $region17
    $region16: #{tpu_custom_call.1} parent=1 // pred_region
      %v44 = vld [vmem:[#allocation2] sm:$0xff]
      %v45 = vmul.f32 %v44, 0.00390625
      %v46 = vlog2.pop %v45
      %v47 = vmul.f32 %v46, 0.6931472
      %v48 = vmul.f32 %v47, 0.33333334
      %v49 = vmul.f32 %v48, 1.442695
      %v50 = vpow.pop %v49
      %51 = vst.msk [vmem:[%s1] sm:$0xff] %vm39, %v50
    $region17: #{tpu_custom_call.1} parent=1 // pred_fallthru
      _
    // Predicated region
    $region18: #{tpu_custom_call.1} parent=1 // pred_check
      _
    $region19: #{tpu_custom_call.1} parent=1 // pred_check_branch
      %53 = sbr.rel (0) target = $region21
    $region20: #{tpu_custom_call.1} parent=1 // pred_region
      _
    $region21: #{tpu_custom_call.1} parent=1 // pred_fallthru
      _
    // Predicated region
    $region22: #{tpu_custom_call.1} parent=1 // pred_check
      _
    $region23: #{tpu_custom_call.1} parent=1 // pred_check_branch
      %55 = sbr.rel (0) target = $region25
    $region24: #{tpu_custom_call.1} parent=1 // pred_region
      _
    $region25: #{tpu_custom_call.1} parent=1 // pred_fallthru
      _
    %56 = vsyncpa [#allocation4], 1

</llo_original>
